<compile_context>
chip_gen: v6e
topology: v6e:2x2x1
jax: 0.10.0
libtpu: 0.0.40
codegen_flags: <defaults>
</compile_context>

<pallas_src>
import jax
import jax.numpy as jnp
from jax.experimental import pallas as pl
from jax.experimental.pallas import tpu as pltpu


# ------------------------------ helpers ------------------------------ #

def _round_up(n, m):
    return ((n + m - 1) // m) * m


def _vmem_spec():
    # Whole array, resident in VMEM, no grid / no pipelining.
    return pl.BlockSpec(memory_space=pltpu.MemorySpace.VMEM)


# ------------------------------ Pallas kernel ------------------------------ #

def _make_fused_decoder_kernel(layer_meta, final_meta):
    """Fused kernel for all top-down layers + final Linear.

    Args (refs):
      h0_ref  : [B, latent_dims[0]]
      mu_ref  : [L, B, z_max]  stacked encoder mus (levels 1..L), zero-padded
      slab_ref: [R, W]         packed params (w1,b1,w2_mu,b2_mu per layer; wf,bf)
      out_ref : [B, output_dim]

    layer_meta: tuple of (w1_off, in_dim, hid, b1_off, w2_off, z, b2_off)
    final_meta: (wf_off, in_dim, out_dim, bf_off)
    All offsets/sizes are static Python ints (8-aligned rows, lane slices from 0).
    The 0.5 averaging is pre-folded into the next layer's w1 / the final wf,
    so each layer ends with a single add.
    """

    def kernel(h0_ref, mu_ref, slab_ref, out_ref):
        h = h0_ref[...]
        for i, (w1_off, in_d, hid, b1_off, w2_off, z, b2_off) in enumerate(layer_meta):
            w1 = slab_ref[w1_off:w1_off + in_d, 0:hid]
            b1 = slab_ref[b1_off:b1_off + 1, 0:hid]
            a = jnp.maximum(
                jnp.dot(h, w1, preferred_element_type=jnp.float32) + b1, 0.0)
            # w2/b2 were pre-sliced to the mu half at prep time (log_var is dead).
            w2 = slab_ref[w2_off:w2_off + hid, 0:z]
            b2 = slab_ref[b2_off:b2_off + 1, 0:z]
            mu_dec = jnp.dot(a, w2, preferred_element_type=jnp.float32) + b2
            # (mu_enc + mu_dec) / 2: the /2 is folded into the consumer weights.
            h = mu_ref[i, :, 0:z] + mu_dec
        wf_off, in_d, out_d, bf_off = final_meta
        wf = slab_ref[wf_off:wf_off + in_d, 0:out_d]
        bf = slab_ref[bf_off:bf_off + 1, 0:out_d]
        out_ref[...] = (
            jnp.dot(h, wf, preferred_element_type=jnp.float32) + bf
        ).astype(out_ref.dtype)

    return kernel


# --------------------- one-time parameter preparation ---------------------- #

def prepare_decoder_params(params):
    """One-time prep: slice mu halves, fold the 0.5 average, pack one slab.

    Returns a dict with the packed slab (device array) and static layout
    metadata consumed by the kernel factory.  Done ONCE, not per forward call.
    """
    layers = params["layers"]
    wf, bf = params["final"]
    dtype = wf.dtype

    tensors = []      # (row_offset, 2-D array) in slab order
    layer_meta = []
    z_dims = []
    row = 0

    def add(arr):
        nonlocal row
        off = row
        row += _round_up(arr.shape[0], 8)   # keep every tensor 8-row aligned
        tensors.append((off, arr))
        return off

    for i, (w1, b1, w2, b2) in enumerate(layers):
        z = w2.shape[1] // 2
        z_dims.append(z)
        # Fold the (mu_enc + mu_dec)/2 of the *previous* layer into this w1.
        w1p = (w1 * jnp.asarray(0.5, dtype)) if i > 0 else w1
        b1p = b1.reshape(1, -1)
        w2p = w2[:, :z]                      # drop dead log_var columns
        b2p = b2.reshape(1, -1)[:, :z]
        in_d, hid = w1p.shape
        w1_off = add(w1p)
        b1_off = add(b1p)
        w2_off = add(w2p)
        b2_off = add(b2p)
        layer_meta.append((w1_off, in_d, hid, b1_off, w2_off, z, b2_off))

    # Fold the last layer's /2 into the final Linear's weight.
    wfp = (wf * jnp.asarray(0.5, dtype)) if layers else wf
    bfp = bf.reshape(1, -1)
    wf_off = add(wfp)
    bf_off = add(bfp)
    final_meta = (wf_off, wfp.shape[0], wfp.shape[1], bf_off)

    R = _round_up(row, 8)
    W = max(arr.shape[1] for _, arr in tensors)
    slab = jnp.zeros((R, W), dtype)
    for off, arr in tensors:
        slab = slab.at[off:off + arr.shape[0], 0:arr.shape[1]].set(arr.astype(dtype))

    slab_bytes = slab.size * jnp.dtype(dtype).itemsize
    assert slab_bytes < 16 * 1024 * 1024, (
        "param slab too large for whole-array-in-VMEM design; switch to a "
        "tiled/pipelined grid (v7x VMEM is 64 MiB physical, 32 MiB scoped).")

    return {
        "slab": slab,
        "layer_meta": tuple(layer_meta),
        "final_meta": final_meta,
        "z_dims": tuple(z_dims),
        "out_dim": final_meta[2],
    }


def stack_encoder_mus(encoder_stats, z_dims):
    """Stack encoder mus (levels 1..L) into one [L, B, z_max] operand.

    In a full pipeline the encoder would emit this layout directly; doing it
    here is one cheap op replacing L separate kernel operands/DMAs.
    """
    B = encoder_stats[0][0].shape[0]
    dtype = encoder_stats[0][0].dtype
    if not z_dims:
        return jnp.zeros((1, B, 8), dtype)   # dummy, unused by the kernel
    z_max = max(z_dims)
    mus = []
    for i, z in enumerate(z_dims):
        mu = encoder_stats[i + 1][0]
        if z < z_max:
            mu = jnp.pad(mu, ((0, 0), (0, z_max - z)))
        mus.append(mu)
    return jnp.stack(mus, axis=0)


# ------------------------------ kernel wrapper ------------------------------ #

def top_down_decoder_forward(prepared, z_list, encoder_stats, mu_stack=None):
    """Mirrors TopDownDecoder.forward: returns (final_layer(h), z_list).

    Per-call work is exactly: (optional) mu stacking + ONE fused pallas_call
    with 3 VMEM operands (h0, mu stack, param slab).
    """
    h0 = z_list[0]
    B = h0.shape[0]
    if mu_stack is None:
        mu_stack = stack_encoder_mus(encoder_stats, prepared["z_dims"])

    out = pl.pallas_call(
        _make_fused_decoder_kernel(prepared["layer_meta"], prepared["final_meta"]),
        out_shape=jax.ShapeDtypeStruct((B, prepared["out_dim"]), h0.dtype),
        in_specs=[_vmem_spec(), _vmem_spec(), _vmem_spec()],
        out_specs=_vmem_spec(),
    )(h0, mu_stack, prepared["slab"])
    return out, z_list


# -------------------------- module (params + refs) -------------------------- #

def init_params(key, latent_dims, hidden_dims, output_dim):
    params = {"layers": []}
    prev = latent_dims[0]
    for h_dim, z_dim in zip(hidden_dims[1:], latent_dims[1:]):
        key, k1, k2, k3, k4 = jax.random.split(key, 5)
        w1 = jax.random.normal(k1, (prev, h_dim), jnp.float32) / jnp.sqrt(prev)
        b1 = jax.random.normal(k2, (1, h_dim), jnp.float32) * 0.01
        w2 = jax.random.normal(k3, (h_dim, 2 * z_dim), jnp.float32) / jnp.sqrt(h_dim)
        b2 = jax.random.normal(k4, (1, 2 * z_dim), jnp.float32) * 0.01
        params["layers"].append((w1, b1, w2, b2))
        prev = z_dim
    key, k1, k2 = jax.random.split(key, 3)
    wf = jax.random.normal(k1, (prev, output_dim), jnp.float32) / jnp.sqrt(prev)
    bf = jax.random.normal(k2, (1, output_dim), jnp.float32) * 0.01
    params["final"] = (wf, bf)
    return params


def reference_forward(params, z_list, encoder_stats):
    """Pure-JAX reference (same math as the PyTorch module, full w2/b2)."""
    h = z_list[0]
    for i, (w1, b1, w2, b2) in enumerate(params["layers"]):
        mu_enc, log_var_enc = encoder_stats[i + 1]
        out = jnp.maximum(h @ w1 + b1, 0.0) @ w2 + b2
        z = mu_enc.shape[-1]
        mu_dec, log_var_dec = out[:, :z], out[:, z:]
        mu = (mu_enc + mu_dec) / 2
        log_var = (log_var_enc + log_var_dec) / 2  # unused downstream, as in torch
        del log_var
        h = mu
    wf, bf = params["final"]
    return h @ wf + bf, z_list


# ----------------------------------- main ----------------------------------- #

if __name__ == "__main__":
    latent_dims = [8, 8, 8]
    hidden_dims = [32, 32, 32]
    output_dim = 16
    B = 8  # multiple of 8 -> sublane-dense loads/stores and full MXU LHS rows

    key = jax.random.PRNGKey(0)
    key, pkey = jax.random.split(key)
    params = init_params(pkey, latent_dims, hidden_dims, output_dim)

    # One-time param prep (slicing, 0.5 folding, slab packing) -- NOT per call.
    prepared = prepare_decoder_params(params)

    # z_list: one sample per level; only z_list[0] feeds the decoder.
    z_list = []
    for d in latent_dims:
        key, k = jax.random.split(key)
        z_list.append(jax.random.normal(k, (B, d), jnp.float32))

    # encoder_stats: (mu, log_var) per level; levels 1.. are consumed.
    encoder_stats = []
    for d in latent_dims:
        key, k1, k2 = jax.random.split(key, 3)
        encoder_stats.append(
            (jax.random.normal(k1, (B, d), jnp.float32),
             jax.random.normal(k2, (B, d), jnp.float32))
        )

    out, z_out = top_down_decoder_forward(prepared, z_list, encoder_stats)
    out = jax.block_until_ready(out)

    ref_out, _ = reference_forward(params, z_list, encoder_stats)
    assert out.shape == (B, output_dim)
    assert len(z_out) == len(z_list)
    assert jnp.allclose(out, ref_out, rtol=1e-5, atol=1e-5), "mismatch vs reference"

    print("KERNEL_OK")
</pallas_src>

<mosaic_0001>
module attributes {stable_mosaic.version = 11 : i64} {
  func.func @kernel(%arg0: memref<8x8xf32, #tpu.memory_space<vmem>>, %arg1: memref<2x8x8xf32, #tpu.memory_space<vmem>>, %arg2: memref<128x32xf32, #tpu.memory_space<vmem>>, %arg3: memref<8x16xf32, #tpu.memory_space<vmem>>) attributes {dimension_semantics = [], scalar_prefetch = 0 : i64, scratch_operands = 0 : i64, tpu.core_type = #tpu.core_type<tc>} {
    %c0 = arith.constant 0 : index
    %c0_0 = arith.constant 0 : index
    %0 = vector.load %arg0[%c0, %c0_0] : memref<8x8xf32, #tpu.memory_space<vmem>>, vector<8x8xf32>
    %c0_1 = arith.constant 0 : index
    %c0_2 = arith.constant 0 : index
    %1 = vector.load %arg2[%c0_1, %c0_2] : memref<128x32xf32, #tpu.memory_space<vmem>>, vector<8x32xf32>
    %c8 = arith.constant 8 : index
    %c0_3 = arith.constant 0 : index
    %2 = vector.load %arg2[%c8, %c0_3] : memref<128x32xf32, #tpu.memory_space<vmem>>, vector<1x32xf32>
    %cst = arith.constant dense<0.000000e+00> : vector<8x32xf32>
    %3 = tpu.matmul %0, %1, %cst {dimension_numbers = #tpu.dot_dimension_numbers<[1], [0], [0], [1], [0, 0, 1, 1], [], []>} : vector<8x8xf32>, vector<8x32xf32>, vector<8x32xf32> -> vector<8x32xf32>
    %4 = vector.broadcast %2 : vector<1x32xf32> to vector<8x32xf32>
    %5 = arith.addf %3, %4 : vector<8x32xf32>
    %cst_4 = arith.constant 0.000000e+00 : f32
    %6 = vector.broadcast %cst_4 : f32 to vector<8x32xf32>
    %7 = arith.maximumf %5, %6 : vector<8x32xf32>
    %c16 = arith.constant 16 : index
    %c0_5 = arith.constant 0 : index
    %8 = vector.load %arg2[%c16, %c0_5] : memref<128x32xf32, #tpu.memory_space<vmem>>, vector<32x8xf32>
    %c48 = arith.constant 48 : index
    %c0_6 = arith.constant 0 : index
    %9 = vector.load %arg2[%c48, %c0_6] : memref<128x32xf32, #tpu.memory_space<vmem>>, vector<1x8xf32>
    %cst_7 = arith.constant dense<0.000000e+00> : vector<8x8xf32>
    %10 = tpu.matmul %7, %8, %cst_7 {dimension_numbers = #tpu.dot_dimension_numbers<[1], [0], [0], [1], [0, 0, 1, 1], [], []>} : vector<8x32xf32>, vector<32x8xf32>, vector<8x8xf32> -> vector<8x8xf32>
    %11 = vector.broadcast %9 : vector<1x8xf32> to vector<8x8xf32>
    %12 = arith.addf %10, %11 : vector<8x8xf32>
    %c0_8 = arith.constant 0 : index
    %c0_9 = arith.constant 0 : index
    %c0_10 = arith.constant 0 : index
    %13 = vector.load %arg1[%c0_8, %c0_9, %c0_10] : memref<2x8x8xf32, #tpu.memory_space<vmem>>, vector<1x8x8xf32>
    %14 = vector.shape_cast %13 : vector<1x8x8xf32> to vector<8x8xf32>
    %15 = arith.addf %14, %12 : vector<8x8xf32>
    %c56 = arith.constant 56 : index
    %c0_11 = arith.constant 0 : index
    %16 = vector.load %arg2[%c56, %c0_11] : memref<128x32xf32, #tpu.memory_space<vmem>>, vector<8x32xf32>
    %c64 = arith.constant 64 : index
    %c0_12 = arith.constant 0 : index
    %17 = vector.load %arg2[%c64, %c0_12] : memref<128x32xf32, #tpu.memory_space<vmem>>, vector<1x32xf32>
    %cst_13 = arith.constant dense<0.000000e+00> : vector<8x32xf32>
    %18 = tpu.matmul %15, %16, %cst_13 {dimension_numbers = #tpu.dot_dimension_numbers<[1], [0], [0], [1], [0, 0, 1, 1], [], []>} : vector<8x8xf32>, vector<8x32xf32>, vector<8x32xf32> -> vector<8x32xf32>
    %19 = vector.broadcast %17 : vector<1x32xf32> to vector<8x32xf32>
    %20 = arith.addf %18, %19 : vector<8x32xf32>
    %cst_14 = arith.constant 0.000000e+00 : f32
    %21 = vector.broadcast %cst_14 : f32 to vector<8x32xf32>
    %22 = arith.maximumf %20, %21 : vector<8x32xf32>
    %c72 = arith.constant 72 : index
    %c0_15 = arith.constant 0 : index
    %23 = vector.load %arg2[%c72, %c0_15] : memref<128x32xf32, #tpu.memory_space<vmem>>, vector<32x8xf32>
    %c104 = arith.constant 104 : index
    %c0_16 = arith.constant 0 : index
    %24 = vector.load %arg2[%c104, %c0_16] : memref<128x32xf32, #tpu.memory_space<vmem>>, vector<1x8xf32>
    %cst_17 = arith.constant dense<0.000000e+00> : vector<8x8xf32>
    %25 = tpu.matmul %22, %23, %cst_17 {dimension_numbers = #tpu.dot_dimension_numbers<[1], [0], [0], [1], [0, 0, 1, 1], [], []>} : vector<8x32xf32>, vector<32x8xf32>, vector<8x8xf32> -> vector<8x8xf32>
    %26 = vector.broadcast %24 : vector<1x8xf32> to vector<8x8xf32>
    %27 = arith.addf %25, %26 : vector<8x8xf32>
    %c1 = arith.constant 1 : index
    %c0_18 = arith.constant 0 : index
    %c0_19 = arith.constant 0 : index
    %28 = vector.load %arg1[%c1, %c0_18, %c0_19] : memref<2x8x8xf32, #tpu.memory_space<vmem>>, vector<1x8x8xf32>
    %29 = vector.shape_cast %28 : vector<1x8x8xf32> to vector<8x8xf32>
    %30 = arith.addf %29, %27 : vector<8x8xf32>
    %c112 = arith.constant 112 : index
    %c0_20 = arith.constant 0 : index
    %31 = vector.load %arg2[%c112, %c0_20] : memref<128x32xf32, #tpu.memory_space<vmem>>, vector<8x16xf32>
    %c120 = arith.constant 120 : index
    %c0_21 = arith.constant 0 : index
    %32 = vector.load %arg2[%c120, %c0_21] : memref<128x32xf32, #tpu.memory_space<vmem>>, vector<1x16xf32>
    %cst_22 = arith.constant dense<0.000000e+00> : vector<8x16xf32>
    %33 = tpu.matmul %30, %31, %cst_22 {dimension_numbers = #tpu.dot_dimension_numbers<[1], [0], [0], [1], [0, 0, 1, 1], [], []>} : vector<8x8xf32>, vector<8x16xf32>, vector<8x16xf32> -> vector<8x16xf32>
    %34 = vector.broadcast %32 : vector<1x16xf32> to vector<8x16xf32>
    %35 = arith.addf %33, %34 : vector<8x16xf32>
    %c0_23 = arith.constant 0 : index
    %c0_24 = arith.constant 0 : index
    %36 = vector.load %arg3[%c0_23, %c0_24] : memref<8x16xf32, #tpu.memory_space<vmem>>, vector<8x16xf32>
    tpu.vector_store %arg3[%c0_23, %c0_24], %35 {strides = array<i32>} : memref<8x16xf32, #tpu.memory_space<vmem>>, vector<8x16xf32>,
    return
  }
}

</mosaic_0001>

<llo_original>
// kernel: tpu_custom_call.1
$region0: #{tpu_custom_call.1}
  #allocation0 [shape = 'u32[]', space=smem, size = 0x4, offset = 0x4, fixed_abs, tag = 'smem constant byte address 0x4 - core index']
  #allocation1 [shape = 'u32[144,128]{1,0:T(1,128)}', space=vmem, size = 0x12000, scoped, tag = 'internal scratch']
  %s0 = inlined_call_operand.vmem [shape: f32[8,8], index: 0, kind: input, shape index: {}]
  %s1 = inlined_call_operand.vmem [shape: f32[2,8,8], index: 1, kind: input, shape index: {}]
  %s2 = inlined_call_operand.vmem [shape: f32[128,32], index: 2, kind: input, shape index: {}]
  %s3 = inlined_call_operand.hbm [shape: f32[8,16], index: 3, kind: output, shape index: {}]
  %s4 = sld [smem:[#allocation0]]
  $region22: #{tpu_custom_call.1} parent=0
    _
  %s6 = ssub.s32 1, %s4
  %s7 = scalar_select 0, %s6, %s4
  $region1: #{tpu_custom_call.1} parent=0
    #allocation2 [shape = 'u8[4096]{0}', space=vmem, size = 0x1000, scoped, tag = 'output window, operand 0, single buffered']
    #allocation3 [shape = 's32[1]{0}', space=sflag, size = 0x4, scoped, tag = 'scoped memory for tpu_custom_call.1']
    %8 = vsyncpa [#allocation3], 0
    // Predicated region
    $region2: #{tpu_custom_call.1} parent=1 // pred_check
      _
    $region3: #{tpu_custom_call.1} parent=1 // pred_check_branch
      %10 = sbr.rel (0) target = $region5
    $region4: #{tpu_custom_call.1} parent=1 // pred_region
      _
    $region5: #{tpu_custom_call.1} parent=1 // pred_fallthru
      _
    // Predicated region
    $region6: #{tpu_custom_call.1} parent=1 // pred_check
      _
    $region7: #{tpu_custom_call.1} parent=1 // pred_check_branch
      %12 = sbr.rel (0) target = $region9
    $region8: #{tpu_custom_call.1} parent=1 // pred_region
      _
    $region9: #{tpu_custom_call.1} parent=1 // pred_fallthru
      _
    // Predicated region
    $region10: #{tpu_custom_call.1} parent=1 // pred_check
      _
    $region11: #{tpu_custom_call.1} parent=1 // pred_check_branch
      %14 = sbr.rel (0) target = $region13
    $region12: #{tpu_custom_call.1} parent=1 // pred_region
      _
    $region13: #{tpu_custom_call.1} parent=1 // pred_fallthru
      _
    %v15 = vld [vmem:[%s0] sm:$0xff]
    %v16 = vld [vmem:[%s2] sm:$0xff]
    %v17 = vld [vmem:[%s2 + $0x8] sm:$0x1]
    %v18 = vlaneseq
    %v19 = vshrl.u32 %v18, 7
    %v20 = vsub.s32 0, %v19
    %v21 = vrot.slane %v17, %v20
    %vm22 = vcmask 64512
    %v24 = vsel %vm22, %v15, 0
    %26 = vmatprep.subr.mxu0 0.0
    %27 = vmatpush1.msra.mxu0 0.0
    %28 = vmatprep.subr.mxu0 0.0
    %29 = vmatpush1.msra.mxu0 0.0
    %30 = vmatprep.subr.mxu0 0.0
    %31 = vmatpush1.msra.mxu0 0.0
    %32 = vmatprep.subr.mxu0 0.0
    %33 = vmatpush1.msra.mxu0 0.0
    %34 = vmatprep.subr.mxu0 0.0
    %35 = vmatpush1.msra.mxu0 0.0
    %36 = vmatprep.subr.mxu0 0.0
    %37 = vmatpush1.msra.mxu0 0.0
    %38 = vmatprep.subr.mxu0 0.0
    %39 = vmatpush1.msra.mxu0 0.0
    %40 = vmatprep.subr.mxu0 0.0
    %41 = vmatpush1.msra.mxu0 0.0
    %42 = vmatprep.subr.mxu0 0.0
    %43 = vmatpush1.msra.mxu0 0.0
    %44 = vmatprep.subr.mxu0 0.0
    %45 = vmatpush1.msra.mxu0 0.0
    %46 = vmatprep.subr.mxu0 0.0
    %47 = vmatpush1.msra.mxu0 0.0
    %48 = vmatprep.subr.mxu0 0.0
    %49 = vmatpush1.msra.mxu0 0.0
    %50 = vmatprep.subr.mxu0 0.0
    %51 = vmatpush1.msra.mxu0 0.0
    %52 = vmatprep.subr.mxu0 0.0
    %53 = vmatpush1.msra.mxu0 0.0
    %54 = vmatprep.subr.mxu0 0.0
    %55 = vmatpush1.msra.mxu0 0.0
    %56 = vmatprep.subr.mxu0 0.0
    %57 = vmatpush1.msra.mxu0 %v16
    %58 = vmatprep.subr.mxu0 0.0
    %59 = vmatpush2.msra.mxu0 0.0
    %60 = vmatprep.subr.mxu0 0.0
    %61 = vmatpush2.msra.mxu0 0.0
    %62 = vmatprep.subr.mxu0 0.0
    %63 = vmatpush2.msra.mxu0 0.0
    %64 = vmatprep.subr.mxu0 0.0
    %65 = vmatpush2.msra.mxu0 0.0
    %66 = vmatprep.subr.mxu0 0.0
    %67 = vmatpush2.msra.mxu0 0.0
    %68 = vmatprep.subr.mxu0 0.0
    %69 = vmatpush2.msra.mxu0 0.0
    %70 = vmatprep.subr.mxu0 0.0
    %71 = vmatpush2.msra.mxu0 0.0
    %72 = vmatprep.subr.mxu0 0.0
    %73 = vmatpush2.msra.mxu0 0.0
    %74 = vmatprep.subr.mxu0 0.0
    %75 = vmatpush2.msra.mxu0 0.0
    %76 = vmatprep.subr.mxu0 0.0
    %77 = vmatpush2.msra.mxu0 0.0
    %78 = vmatprep.subr.mxu0 0.0
    %79 = vmatpush2.msra.mxu0 0.0
    %80 = vmatprep.subr.mxu0 0.0
    %81 = vmatpush2.msra.mxu0 0.0
    %82 = vmatprep.subr.mxu0 0.0
    %83 = vmatpush2.msra.mxu0 0.0
    %84 = vmatprep.subr.mxu0 0.0
    %85 = vmatpush2.msra.mxu0 0.0
    %86 = vmatprep.subr.mxu0 0.0
    %87 = vmatpush2.msra.mxu0 0.0
    %88 = vmatprep.subr.mxu0 0.0
    %89 = vmatpush2.msra.mxu0 0.0
    %90 = vmatprep.mubr.f32.mxu0 0.0
    %91 = vmatmul.mubr.f32.gmra.mxu0 %v24
    %v92 = vpop.f32.mrf.mxu0
    %v93 = vadd.f32 %v21, %v92
    %v94 = vpop.f32.mrf.mxu0
    %95 = vdwg.mxu0
    %v96 = vmax.f32 %v93, 0.0
    %v97 = vld [vmem:[%s2 + $0x10] sm:$0xff]
    %v98 = vld [vmem:[%s2 + $0x18] sm:$0xff]
    %v99 = vld [vmem:[%s2 + $0x20] sm:$0xff]
    %v100 = vld [vmem:[%s2 + $0x28] sm:$0xff]
    %v101 = vld [vmem:[%s2 + $0x30] sm:$0x1]
    %v102 = vlaneseq
    %v103 = vshrl.u32 %v102, 7
    %v104 = vsub.s32 0, %v103
    %v105 = vrot.slane %v101, %v104
    %vm106 = vcmask 261120
    %v108 = vsel %vm106, %v96, 0
    %110 = vmatprep.subr.mxu0 0.0
    %111 = vmatpush1.msra.mxu0 0.0
    %112 = vmatprep.subr.mxu0 0.0
    %113 = vmatpush1.msra.mxu0 0.0
    %114 = vmatprep.subr.mxu0 0.0
    %115 = vmatpush1.msra.mxu0 0.0
    %116 = vmatprep.subr.mxu0 0.0
    %117 = vmatpush1.msra.mxu0 0.0
    %118 = vmatprep.subr.mxu0 0.0
    %119 = vmatpush1.msra.mxu0 0.0
    %120 = vmatprep.subr.mxu0 0.0
    %121 = vmatpush1.msra.mxu0 0.0
    %122 = vmatprep.subr.mxu0 0.0
    %123 = vmatpush1.msra.mxu0 0.0
    %124 = vmatprep.subr.mxu0 0.0
    %125 = vmatpush1.msra.mxu0 0.0
    %126 = vmatprep.subr.mxu0 0.0
    %127 = vmatpush1.msra.mxu0 0.0
    %128 = vmatprep.subr.mxu0 0.0
    %129 = vmatpush1.msra.mxu0 0.0
    %130 = vmatprep.subr.mxu0 0.0
    %131 = vmatpush1.msra.mxu0 0.0
    %132 = vmatprep.subr.mxu0 0.0
    %133 = vmatpush1.msra.mxu0 0.0
    %134 = vmatprep.subr.mxu0 0.0
    %135 = vmatpush1.msra.mxu0 %v100
    %136 = vmatprep.subr.mxu0 0.0
    %137 = vmatpush1.msra.mxu0 %v99
    %138 = vmatprep.subr.mxu0 0.0
    %139 = vmatpush1.msra.mxu0 %v98
    %140 = vmatprep.subr.mxu0 0.0
    %141 = vmatpush1.msra.mxu0 %v97
    %142 = vmatprep.subr.mxu0 0.0
    %143 = vmatpush2.msra.mxu0 0.0
    %144 = vmatprep.subr.mxu0 0.0
    %145 = vmatpush2.msra.mxu0 0.0
    %146 = vmatprep.subr.mxu0 0.0
    %147 = vmatpush2.msra.mxu0 0.0
    %148 = vmatprep.subr.mxu0 0.0
    %149 = vmatpush2.msra.mxu0 0.0
    %150 = vmatprep.subr.mxu0 0.0
    %151 = vmatpush2.msra.mxu0 0.0
    %152 = vmatprep.subr.mxu0 0.0
    %153 = vmatpush2.msra.mxu0 0.0
    %154 = vmatprep.subr.mxu0 0.0
    %155 = vmatpush2.msra.mxu0 0.0
    %156 = vmatprep.subr.mxu0 0.0
    %157 = vmatpush2.msra.mxu0 0.0
    %158 = vmatprep.subr.mxu0 0.0
    %159 = vmatpush2.msra.mxu0 0.0
    %160 = vmatprep.subr.mxu0 0.0
    %161 = vmatpush2.msra.mxu0 0.0
    %162 = vmatprep.subr.mxu0 0.0
    %163 = vmatpush2.msra.mxu0 0.0
    %164 = vmatprep.subr.mxu0 0.0
    %165 = vmatpush2.msra.mxu0 0.0
    %166 = vmatprep.subr.mxu0 0.0
    %167 = vmatpush2.msra.mxu0 0.0
    %168 = vmatprep.subr.mxu0 0.0
    %169 = vmatpush2.msra.mxu0 0.0
    %170 = vmatprep.subr.mxu0 0.0
    %171 = vmatpush2.msra.mxu0 0.0
    %172 = vmatprep.subr.mxu0 0.0
    %173 = vmatpush2.msra.mxu0 0.0
    %174 = vmatprep.mubr.f32.mxu0 0.0
    %175 = vmatmul.mubr.f32.gmra.mxu0 %v108
    %v176 = vpop.f32.mrf.mxu0
    %v177 = vadd.f32 %v105, %v176
    %v178 = vpop.f32.mrf.mxu0
    %179 = vdwg.mxu0
    %v180 = vld [vmem:[%s1] sm:$0xff]
    %v181 = vadd.f32 %v180, %v177
    %v182 = vld [vmem:[%s2 + $0x38] sm:$0xff]
    %v183 = vld [vmem:[%s2 + $0x40] sm:$0x1]
    %v184 = vlaneseq
    %v185 = vshrl.u32 %v184, 7
    %v186 = vsub.s32 0, %v185
    %v187 = vrot.slane %v183, %v186
    %v189 = vsel %vm22, %v181, 0
    %191 = vmatprep.subr.mxu0 0.0
    %192 = vmatpush1.msra.mxu0 0.0
    %193 = vmatprep.subr.mxu0 0.0
    %194 = vmatpush1.msra.mxu0 0.0
    %195 = vmatprep.subr.mxu0 0.0
    %196 = vmatpush1.msra.mxu0 0.0
    %197 = vmatprep.subr.mxu0 0.0
    %198 = vmatpush1.msra.mxu0 0.0
    %199 = vmatprep.subr.mxu0 0.0
    %200 = vmatpush1.msra.mxu0 0.0
    %201 = vmatprep.subr.mxu0 0.0
    %202 = vmatpush1.msra.mxu0 0.0
    %203 = vmatprep.subr.mxu0 0.0
    %204 = vmatpush1.msra.mxu0 0.0
    %205 = vmatprep.subr.mxu0 0.0
    %206 = vmatpush1.msra.mxu0 0.0
    %207 = vmatprep.subr.mxu0 0.0
    %208 = vmatpush1.msra.mxu0 0.0
    %209 = vmatprep.subr.mxu0 0.0
    %210 = vmatpush1.msra.mxu0 0.0
    %211 = vmatprep.subr.mxu0 0.0
    %212 = vmatpush1.msra.mxu0 0.0
    %213 = vmatprep.subr.mxu0 0.0
    %214 = vmatpush1.msra.mxu0 0.0
    %215 = vmatprep.subr.mxu0 0.0
    %216 = vmatpush1.msra.mxu0 0.0
    %217 = vmatprep.subr.mxu0 0.0
    %218 = vmatpush1.msra.mxu0 0.0
    %219 = vmatprep.subr.mxu0 0.0
    %220 = vmatpush1.msra.mxu0 0.0
    %221 = vmatprep.subr.mxu0 0.0
    %222 = vmatpush1.msra.mxu0 %v182
    %223 = vmatprep.subr.mxu0 0.0
    %224 = vmatpush2.msra.mxu0 0.0
    %225 = vmatprep.subr.mxu0 0.0
    %226 = vmatpush2.msra.mxu0 0.0
    %227 = vmatprep.subr.mxu0 0.0
    %228 = vmatpush2.msra.mxu0 0.0
    %229 = vmatprep.subr.mxu0 0.0
    %230 = vmatpush2.msra.mxu0 0.0
    %231 = vmatprep.subr.mxu0 0.0
    %232 = vmatpush2.msra.mxu0 0.0
    %233 = vmatprep.subr.mxu0 0.0
    %234 = vmatpush2.msra.mxu0 0.0
    %235 = vmatprep.subr.mxu0 0.0
    %236 = vmatpush2.msra.mxu0 0.0
    %237 = vmatprep.subr.mxu0 0.0
    %238 = vmatpush2.msra.mxu0 0.0
    %239 = vmatprep.subr.mxu0 0.0
    %240 = vmatpush2.msra.mxu0 0.0
    %241 = vmatprep.subr.mxu0 0.0
    %242 = vmatpush2.msra.mxu0 0.0
    %243 = vmatprep.subr.mxu0 0.0
    %244 = vmatpush2.msra.mxu0 0.0
    %245 = vmatprep.subr.mxu0 0.0
    %246 = vmatpush2.msra.mxu0 0.0
    %247 = vmatprep.subr.mxu0 0.0
    %248 = vmatpush2.msra.mxu0 0.0
    %249 = vmatprep.subr.mxu0 0.0
    %250 = vmatpush2.msra.mxu0 0.0
    %251 = vmatprep.subr.mxu0 0.0
    %252 = vmatpush2.msra.mxu0 0.0
    %253 = vmatprep.subr.mxu0 0.0
    %254 = vmatpush2.msra.mxu0 0.0
    %255 = vmatprep.mubr.f32.mxu0 0.0
    %256 = vmatmul.mubr.f32.gmra.mxu0 %v189
    %v257 = vpop.f32.mrf.mxu0
    %v258 = vadd.f32 %v187, %v257
    %v259 = vpop.f32.mrf.mxu0
    %260 = vdwg.mxu0
    %v261 = vmax.f32 %v258, 0.0
    %v262 = vld [vmem:[%s2 + $0x48] sm:$0xff]
    %v263 = vld [vmem:[%s2 + $0x50] sm:$0xff]
    %v264 = vld [vmem:[%s2 + $0x58] sm:$0xff]
    %v265 = vld [vmem:[%s2 + $0x60] sm:$0xff]
    %v266 = vld [vmem:[%s2 + $0x68] sm:$0x1]
    %v267 = vlaneseq
    %v268 = vshrl.u32 %v267, 7
    %v269 = vsub.s32 0, %v268
    %v270 = vrot.slane %v266, %v269
    %v272 = vsel %vm106, %v261, 0
    %274 = vmatprep.subr.mxu0 0.0
    %275 = vmatpush1.msra.mxu0 0.0
    %276 = vmatprep.subr.mxu0 0.0
    %277 = vmatpush1.msra.mxu0 0.0
    %278 = vmatprep.subr.mxu0 0.0
    %279 = vmatpush1.msra.mxu0 0.0
    %280 = vmatprep.subr.mxu0 0.0
    %281 = vmatpush1.msra.mxu0 0.0
    %282 = vmatprep.subr.mxu0 0.0
    %283 = vmatpush1.msra.mxu0 0.0
    %284 = vmatprep.subr.mxu0 0.0
    %285 = vmatpush1.msra.mxu0 0.0
    %286 = vmatprep.subr.mxu0 0.0
    %287 = vmatpush1.msra.mxu0 0.0
    %288 = vmatprep.subr.mxu0 0.0
    %289 = vmatpush1.msra.mxu0 0.0
    %290 = vmatprep.subr.mxu0 0.0
    %291 = vmatpush1.msra.mxu0 0.0
    %292 = vmatprep.subr.mxu0 0.0
    %293 = vmatpush1.msra.mxu0 0.0
    %294 = vmatprep.subr.mxu0 0.0
    %295 = vmatpush1.msra.mxu0 0.0
    %296 = vmatprep.subr.mxu0 0.0
    %297 = vmatpush1.msra.mxu0 0.0
    %298 = vmatprep.subr.mxu0 0.0
    %299 = vmatpush1.msra.mxu0 %v265
    %300 = vmatprep.subr.mxu0 0.0
    %301 = vmatpush1.msra.mxu0 %v264
    %302 = vmatprep.subr.mxu0 0.0
    %303 = vmatpush1.msra.mxu0 %v263
    %304 = vmatprep.subr.mxu0 0.0
    %305 = vmatpush1.msra.mxu0 %v262
    %306 = vmatprep.subr.mxu0 0.0
    %307 = vmatpush2.msra.mxu0 0.0
    %308 = vmatprep.subr.mxu0 0.0
    %309 = vmatpush2.msra.mxu0 0.0
    %310 = vmatprep.subr.mxu0 0.0
    %311 = vmatpush2.msra.mxu0 0.0
    %312 = vmatprep.subr.mxu0 0.0
    %313 = vmatpush2.msra.mxu0 0.0
    %314 = vmatprep.subr.mxu0 0.0
    %315 = vmatpush2.msra.mxu0 0.0
    %316 = vmatprep.subr.mxu0 0.0
    %317 = vmatpush2.msra.mxu0 0.0
    %318 = vmatprep.subr.mxu0 0.0
    %319 = vmatpush2.msra.mxu0 0.0
    %320 = vmatprep.subr.mxu0 0.0
    %321 = vmatpush2.msra.mxu0 0.0
    %322 = vmatprep.subr.mxu0 0.0
    %323 = vmatpush2.msra.mxu0 0.0
    %324 = vmatprep.subr.mxu0 0.0
    %325 = vmatpush2.msra.mxu0 0.0
    %326 = vmatprep.subr.mxu0 0.0
    %327 = vmatpush2.msra.mxu0 0.0
    %328 = vmatprep.subr.mxu0 0.0
    %329 = vmatpush2.msra.mxu0 0.0
    %330 = vmatprep.subr.mxu0 0.0
    %331 = vmatpush2.msra.mxu0 0.0
    %332 = vmatprep.subr.mxu0 0.0
    %333 = vmatpush2.msra.mxu0 0.0
    %334 = vmatprep.subr.mxu0 0.0
    %335 = vmatpush2.msra.mxu0 0.0
    %336 = vmatprep.subr.mxu0 0.0
    %337 = vmatpush2.msra.mxu0 0.0
    %338 = vmatprep.mubr.f32.mxu0 0.0
    %339 = vmatmul.mubr.f32.gmra.mxu0 %v272
    %v340 = vpop.f32.mrf.mxu0
    %v341 = vadd.f32 %v270, %v340
    %v342 = vpop.f32.mrf.mxu0
    %343 = vdwg.mxu0
    %s344 = scalar_lea.vmem %s1, 8
    %v345 = vld [vmem:[%s344] sm:$0xff]
    %v346 = vadd.f32 %v345, %v341
    %v347 = vld [vmem:[%s2 + $0x70] sm:$0xff]
    %v348 = vld [vmem:[%s2 + $0x78] sm:$0x1]
    %v349 = vlaneseq
    %v350 = vshrl.u32 %v349, 7
    %v351 = vsub.s32 0, %v350
    %v352 = vrot.slane %v348, %v351
    %v354 = vsel %vm22, %v346, 0
    %356 = vmatprep.subr.mxu0 0.0
    %357 = vmatpush1.msra.mxu0 0.0
    %358 = vmatprep.subr.mxu0 0.0
    %359 = vmatpush1.msra.mxu0 0.0
    %360 = vmatprep.subr.mxu0 0.0
    %361 = vmatpush1.msra.mxu0 0.0
    %362 = vmatprep.subr.mxu0 0.0
    %363 = vmatpush1.msra.mxu0 0.0
    %364 = vmatprep.subr.mxu0 0.0
    %365 = vmatpush1.msra.mxu0 0.0
    %366 = vmatprep.subr.mxu0 0.0
    %367 = vmatpush1.msra.mxu0 0.0
    %368 = vmatprep.subr.mxu0 0.0
    %369 = vmatpush1.msra.mxu0 0.0
    %370 = vmatprep.subr.mxu0 0.0
    %371 = vmatpush1.msra.mxu0 0.0
    %372 = vmatprep.subr.mxu0 0.0
    %373 = vmatpush1.msra.mxu0 0.0
    %374 = vmatprep.subr.mxu0 0.0
    %375 = vmatpush1.msra.mxu0 0.0
    %376 = vmatprep.subr.mxu0 0.0
    %377 = vmatpush1.msra.mxu0 0.0
    %378 = vmatprep.subr.mxu0 0.0
    %379 = vmatpush1.msra.mxu0 0.0
    %380 = vmatprep.subr.mxu0 0.0
    %381 = vmatpush1.msra.mxu0 0.0
    %382 = vmatprep.subr.mxu0 0.0
    %383 = vmatpush1.msra.mxu0 0.0
    %384 = vmatprep.subr.mxu0 0.0
    %385 = vmatpush1.msra.mxu0 0.0
    %386 = vmatprep.subr.mxu0 0.0
    %387 = vmatpush1.msra.mxu0 %v347
    %388 = vmatprep.subr.mxu0 0.0
    %389 = vmatpush2.msra.mxu0 0.0
    %390 = vmatprep.subr.mxu0 0.0
    %391 = vmatpush2.msra.mxu0 0.0
    %392 = vmatprep.subr.mxu0 0.0
    %393 = vmatpush2.msra.mxu0 0.0
    %394 = vmatprep.subr.mxu0 0.0
    %395 = vmatpush2.msra.mxu0 0.0
    %396 = vmatprep.subr.mxu0 0.0
    %397 = vmatpush2.msra.mxu0 0.0
    %398 = vmatprep.subr.mxu0 0.0
    %399 = vmatpush2.msra.mxu0 0.0
    %400 = vmatprep.subr.mxu0 0.0
    %401 = vmatpush2.msra.mxu0 0.0
    %402 = vmatprep.subr.mxu0 0.0
    %403 = vmatpush2.msra.mxu0 0.0
    %404 = vmatprep.subr.mxu0 0.0
    %405 = vmatpush2.msra.mxu0 0.0
    %406 = vmatprep.subr.mxu0 0.0
    %407 = vmatpush2.msra.mxu0 0.0
    %408 = vmatprep.subr.mxu0 0.0
    %409 = vmatpush2.msra.mxu0 0.0
    %410 = vmatprep.subr.mxu0 0.0
    %411 = vmatpush2.msra.mxu0 0.0
    %412 = vmatprep.subr.mxu0 0.0
    %413 = vmatpush2.msra.mxu0 0.0
    %414 = vmatprep.subr.mxu0 0.0
    %415 = vmatpush2.msra.mxu0 0.0
    %416 = vmatprep.subr.mxu0 0.0
    %417 = vmatpush2.msra.mxu0 0.0
    %418 = vmatprep.subr.mxu0 0.0
    %419 = vmatpush2.msra.mxu0 0.0
    %420 = vmatprep.mubr.f32.mxu0 0.0
    %421 = vmatmul.mubr.f32.gmra.mxu0 %v354
    %v422 = vpop.f32.mrf.mxu0
    %v423 = vadd.f32 %v352, %v422
    %v424 = vpop.f32.mrf.mxu0
    %425 = vdwg.mxu0
    %vm426 = vcmask 130048
    %427 = vst.msk [vmem:[#allocation2] sm:$0xff] %vm426, %v423
    // Predicated region
    $region14: #{tpu_custom_call.1} parent=1 // pred_check
      _
    $region15: #{tpu_custom_call.1} parent=1 // pred_check_branch
      %429 = sbr.rel (0) target = $region17
    $region16: #{tpu_custom_call.1} parent=1 // pred_region
      %s431 = ssub.s32 128, 128
      %432 = vsyncadd [#allocation3], %s431
      %s434 = sshll.u32 [#allocation2], 4
      %s435 = int_to_ptr.vmem [resolvable:$true] %s434
      %437 = dma.vmem_to_hbm [thread:$0]  %s435, 128, %s3, [#allocation3]
    $region17: #{tpu_custom_call.1} parent=1 // pred_fallthru
      _
    // Predicated region
    $region18: #{tpu_custom_call.1} parent=1 // pred_check
      _
    $region19: #{tpu_custom_call.1} parent=1 // pred_check_branch
      %439 = sbr.rel (0) target = $region21
    $region20: #{tpu_custom_call.1} parent=1 // pred_region
      %440 = dma.done [#allocation3], 128
    $region21: #{tpu_custom_call.1} parent=1 // pred_fallthru
      _
    %441 = vsyncpa [#allocation3], 1

</llo_original>
